<compile_context>
chip_gen: v7x
topology: tpu7x:2x2x1
jax: 0.10.0
libtpu: 0.0.40
codegen_flags: <defaults>
</compile_context>

<pallas_src>
import functools

import jax
import jax.numpy as jnp
from jax import lax
from jax.experimental import pallas as pl
from jax.experimental.pallas import tpu as pltpu

IMG_FEATS = 28 * 28      # 784
LATENT = 10              # true latent size of the module
LATENT_PAD = 128         # lane-aligned latent (cols/rows 10..127 are zero)


def _round_up(x, m):
    return (x + m - 1) // m * m


def sae_kernel(x_ref, we_ref, be_ref, wd_ref, bd_ref, out_ref, rho_ref,
               *, tile_b, b_actual):
    # x_ref  : (tile_b, 784)        input pixels
    # we_ref : (784, LATENT_PAD)    encoder weight (pre-transposed, zero padded)
    # be_ref : (1, LATENT_PAD)      encoder bias  (zero padded)
    # wd_ref : (LATENT_PAD, 784)    decoder weight (pre-transposed, zero padded)
    # bd_ref : (1, 784)             decoder bias
    # out_ref: (tile_b, 784)        reconstruction
    # rho_ref: (1, 8, LATENT_PAD)   per-tile partial sum of h (replicated sublanes)
    x = x_ref[...]

    # Encoder: sigmoid(x @ W_E^T + b_E)  (MXU matmul, f32 accumulate; EUP sigmoid).
    h = jax.nn.sigmoid(
        jnp.dot(x, we_ref[...], preferred_element_type=jnp.float32) + be_ref[...]
    )

    # Per-tile partial sum of h for data_rho.  Rows past the true batch size
    # (present only due to batch padding to a tile multiple) are masked out.
    if b_actual % tile_b != 0:
        row = pl.program_id(0) * tile_b + lax.broadcasted_iota(
            jnp.int32, h.shape, 0)
        h_for_rho = jnp.where(row < b_actual, h, 0.0)
    else:
        h_for_rho = h
    partial = jnp.sum(h_for_rho, axis=0, keepdims=True)          # (1, LATENT_PAD)
    rho_ref[...] = jnp.broadcast_to(partial, rho_ref.shape)

    # Decoder: tanh(h @ W_D^T + b_D).  Padded latent rows of W_D are zero, so
    # the padded columns of h contribute nothing.
    # TODO(synk): if the single EUP slot ever shows up as the binding unit in
    # the bundle dump, swap tanh for a VPU polynomial approximation (kernel is
    # currently HBM-bound, so tanh/sigmoid are free filler).
    out_ref[...] = jnp.tanh(
        jnp.dot(h, wd_ref[...], preferred_element_type=jnp.float32) + bd_ref[...]
    )


@functools.partial(jax.jit, static_argnames=("tile_b",))
def sae_forward(x_img, w_enc, b_enc, w_dec, b_dec, *, tile_b=1024):
    """x_img: (B, 1, 28, 28) or (B, 784) float32.
    Returns (out (B, 784), data_rho (LATENT,)) matching the PyTorch module."""
    B = x_img.shape[0]
    x2d = x_img.reshape(B, IMG_FEATS).astype(jnp.float32)

    # Pre-transpose + zero-pad weights: PyTorch Linear stores (out, in); the
    # kernel wants (in, out) with the latent axis padded to 128 lanes.
    we_t = jnp.zeros((IMG_FEATS, LATENT_PAD), jnp.float32)
    we_t = we_t.at[:, :LATENT].set(w_enc.T.astype(jnp.float32))
    be = jnp.zeros((1, LATENT_PAD), jnp.float32)
    be = be.at[0, :LATENT].set(b_enc.astype(jnp.float32))
    wd_t = jnp.zeros((LATENT_PAD, IMG_FEATS), jnp.float32)
    wd_t = wd_t.at[:LATENT, :].set(w_dec.T.astype(jnp.float32))
    bd = b_dec.reshape(1, IMG_FEATS).astype(jnp.float32)

    # Batch tiling: tile must be a multiple of 8 (sublane); pad B to a tile
    # multiple with zero rows (masked out of rho, sliced off the output).
    tb = _round_up(min(tile_b, _round_up(B, 8)), 8)
    b_pad = _round_up(B, tb)
    num_tiles = b_pad // tb
    if b_pad != B:
        x2d = jnp.pad(x2d, ((0, b_pad - B), (0, 0)))

    kernel = functools.partial(sae_kernel, tile_b=tb, b_actual=B)

    out, rho_part = pl.pallas_call(
        kernel,
        grid=(num_tiles,),
        in_specs=[
            # x: tiled along the batch, pipelined.
            pl.BlockSpec((tb, IMG_FEATS), lambda i: (i, 0)),
            # Weights / biases: constant block index -> loaded once, VMEM-resident.
            pl.BlockSpec((IMG_FEATS, LATENT_PAD), lambda i: (0, 0)),
            pl.BlockSpec((1, LATENT_PAD), lambda i: (0, 0)),
            pl.BlockSpec((LATENT_PAD, IMG_FEATS), lambda i: (0, 0)),
            pl.BlockSpec((1, IMG_FEATS), lambda i: (0, 0)),
        ],
        out_specs=(
            pl.BlockSpec((tb, IMG_FEATS), lambda i: (i, 0)),
            pl.BlockSpec((1, 8, LATENT_PAD), lambda i: (i, 0, 0)),
        ),
        out_shape=(
            jax.ShapeDtypeStruct((b_pad, IMG_FEATS), jnp.float32),
            jax.ShapeDtypeStruct((num_tiles, 8, LATENT_PAD), jnp.float32),
        ),
        compiler_params=pltpu.CompilerParams(
            dimension_semantics=("parallel",),
            # ~15.5 MB working set at tb=1024 (double-buffered x/out tiles +
            # resident weights); raise the scoped limit so v5e's 16 MiB default
            # is not the constraint.  48 MB fits all of v5e/v6e/v7x.
            vmem_limit_bytes=48 * 1024 * 1024),
    )(x2d, we_t, be, wd_t, bd)

    out = out[:B]
    data_rho = rho_part[:, 0, :LATENT].sum(axis=0) / B
    return out, data_rho


def _ref_forward(x_img, w_enc, b_enc, w_dec, b_dec):
    """Pure-JAX reference matching the PyTorch module."""
    x2d = x_img.reshape(x_img.shape[0], IMG_FEATS)
    h = jax.nn.sigmoid(x2d @ w_enc.T + b_enc)
    rho = h.mean(axis=0)
    out = jnp.tanh(h @ w_dec.T + b_dec)
    return out, rho


if __name__ == "__main__":
    key = jax.random.PRNGKey(0)
    k_x, k_we, k_be, k_wd, k_bd, k_x2 = jax.random.split(key, 6)

    # Deterministic parameter init (PyTorch Linear-style uniform bounds).
    enc_bound = 1.0 / jnp.sqrt(jnp.float32(IMG_FEATS))
    dec_bound = 1.0 / jnp.sqrt(jnp.float32(LATENT))
    w_enc = jax.random.uniform(k_we, (LATENT, IMG_FEATS), jnp.float32,
                               -enc_bound, enc_bound)
    b_enc = jax.random.uniform(k_be, (LATENT,), jnp.float32,
                               -enc_bound, enc_bound)
    w_dec = jax.random.uniform(k_wd, (IMG_FEATS, LATENT), jnp.float32,
                               -dec_bound, dec_bound)
    b_dec = jax.random.uniform(k_bd, (IMG_FEATS,), jnp.float32,
                               -dec_bound, dec_bound)

    # Case 1: small batch, single tile.
    B1 = 8
    x_img = jax.random.uniform(k_x, (B1, 1, 28, 28), dtype=jnp.float32)
    out, data_rho = sae_forward(x_img, w_enc, b_enc, w_dec, b_dec)
    out = jax.block_until_ready(out)
    data_rho = jax.block_until_ready(data_rho)
    ref_out, ref_rho = _ref_forward(x_img, w_enc, b_enc, w_dec, b_dec)
    assert out.shape == (B1, IMG_FEATS) and data_rho.shape == (LATENT,)
    assert jnp.allclose(out, ref_out, atol=1e-5, rtol=1e-5)
    assert jnp.allclose(data_rho, ref_rho, atol=1e-5, rtol=1e-5)

    # Case 2: multi-tile grid with a ragged tail (B=20, tile=8 -> 3 tiles,
    # last tile masked for the rho partial sum).
    B2 = 20
    x_img2 = jax.random.uniform(k_x2, (B2, 1, 28, 28), dtype=jnp.float32)
    out2, rho2 = sae_forward(x_img2, w_enc, b_enc, w_dec, b_dec, tile_b=8)
    out2 = jax.block_until_ready(out2)
    rho2 = jax.block_until_ready(rho2)
    ref_out2, ref_rho2 = _ref_forward(x_img2, w_enc, b_enc, w_dec, b_dec)
    assert out2.shape == (B2, IMG_FEATS) and rho2.shape == (LATENT,)
    assert jnp.allclose(out2, ref_out2, atol=1e-5, rtol=1e-5)
    assert jnp.allclose(rho2, ref_rho2, atol=1e-5, rtol=1e-5)

    print("KERNEL_OK")
</pallas_src>

<mosaic_0001>
module attributes {stable_mosaic.version = 11 : i64} {
  func.func @sae_kernel(%arg0: i32, %arg1: memref<8x784xf32, #tpu.memory_space<vmem>>, %arg2: memref<784x128xf32, #tpu.memory_space<vmem>>, %arg3: memref<1x128xf32, #tpu.memory_space<vmem>>, %arg4: memref<128x784xf32, #tpu.memory_space<vmem>>, %arg5: memref<1x784xf32, #tpu.memory_space<vmem>>, %arg6: memref<8x784xf32, #tpu.memory_space<vmem>>, %arg7: memref<1x8x128xf32, #tpu.memory_space<vmem>>) attributes {dimension_semantics = [#tpu.dimension_semantics<parallel>], iteration_bounds = array<i64: 1>, scalar_prefetch = 0 : i64, scratch_operands = 0 : i64, tpu.core_type = #tpu.core_type<tc>, window_params = [{transform_indices = @transform_0, window_bounds = array<i64: 8, 784>}, {pipeline_mode = #tpu.pipeline_mode<synchronous>, transform_indices = @transform_1, window_bounds = array<i64: 784, 128>}, {pipeline_mode = #tpu.pipeline_mode<synchronous>, transform_indices = @transform_2, window_bounds = array<i64: 1, 128>}, {pipeline_mode = #tpu.pipeline_mode<synchronous>, transform_indices = @transform_3, window_bounds = array<i64: 128, 784>}, {pipeline_mode = #tpu.pipeline_mode<synchronous>, transform_indices = @transform_4, window_bounds = array<i64: 1, 784>}, {transform_indices = @transform_5, window_bounds = array<i64: 8, 784>}, {transform_indices = @transform_6, window_bounds = array<i64: 1, 8, 128>}]} {
    %c0 = arith.constant 0 : index
    %c0_0 = arith.constant 0 : index
    %0 = vector.load %arg1[%c0, %c0_0] : memref<8x784xf32, #tpu.memory_space<vmem>>, vector<8x784xf32>
    %c0_1 = arith.constant 0 : index
    %c0_2 = arith.constant 0 : index
    %1 = vector.load %arg2[%c0_1, %c0_2] : memref<784x128xf32, #tpu.memory_space<vmem>>, vector<784x128xf32>
    %cst = arith.constant dense<0.000000e+00> : vector<8x128xf32>
    %2 = tpu.matmul %0, %1, %cst {dimension_numbers = #tpu.dot_dimension_numbers<[1], [0], [0], [1], [0, 0, 1, 1], [], []>} : vector<8x784xf32>, vector<784x128xf32>, vector<8x128xf32> -> vector<8x128xf32>
    %c0_3 = arith.constant 0 : index
    %c0_4 = arith.constant 0 : index
    %3 = vector.load %arg3[%c0_3, %c0_4] : memref<1x128xf32, #tpu.memory_space<vmem>>, vector<1x128xf32>
    %4 = vector.broadcast %3 : vector<1x128xf32> to vector<8x128xf32>
    %5 = arith.addf %2, %4 : vector<8x128xf32>
    %6 = arith.negf %5 : vector<8x128xf32>
    %7 = math.exp %6 : vector<8x128xf32>
    %cst_5 = arith.constant 1.000000e+00 : f32
    %8 = vector.broadcast %cst_5 : f32 to vector<8x128xf32>
    %9 = arith.addf %8, %7 : vector<8x128xf32>
    %10 = arith.divf %8, %9 : vector<8x128xf32>
    %cst_6 = arith.constant dense<0.000000e+00> : vector<128xf32>
    %11 = vector.multi_reduction <add>, %10, %cst_6 [0] : vector<8x128xf32> to vector<128xf32>
    %12 = vector.shape_cast %11 : vector<128xf32> to vector<1x128xf32>
    %13 = vector.shape_cast %12 : vector<1x128xf32> to vector<1x1x128xf32>
    %14 = vector.broadcast %13 : vector<1x1x128xf32> to vector<1x8x128xf32>
    %c0_7 = arith.constant 0 : index
    %c0_8 = arith.constant 0 : index
    %c0_9 = arith.constant 0 : index
    %15 = vector.load %arg7[%c0_7, %c0_8, %c0_9] : memref<1x8x128xf32, #tpu.memory_space<vmem>>, vector<1x8x128xf32>
    tpu.vector_store %arg7[%c0_7, %c0_8, %c0_9], %14 {strides = array<i32>} : memref<1x8x128xf32, #tpu.memory_space<vmem>>, vector<1x8x128xf32>,
    %c0_10 = arith.constant 0 : index
    %c0_11 = arith.constant 0 : index
    %16 = vector.load %arg4[%c0_10, %c0_11] : memref<128x784xf32, #tpu.memory_space<vmem>>, vector<128x784xf32>
    %cst_12 = arith.constant dense<0.000000e+00> : vector<8x784xf32>
    %17 = tpu.matmul %10, %16, %cst_12 {dimension_numbers = #tpu.dot_dimension_numbers<[1], [0], [0], [1], [0, 0, 1, 1], [], []>} : vector<8x128xf32>, vector<128x784xf32>, vector<8x784xf32> -> vector<8x784xf32>
    %c0_13 = arith.constant 0 : index
    %c0_14 = arith.constant 0 : index
    %18 = vector.load %arg5[%c0_13, %c0_14] : memref<1x784xf32, #tpu.memory_space<vmem>>, vector<1x784xf32>
    %19 = vector.broadcast %18 : vector<1x784xf32> to vector<8x784xf32>
    %20 = arith.addf %17, %19 : vector<8x784xf32>
    %21 = math.tanh %20 : vector<8x784xf32>
    %c0_15 = arith.constant 0 : index
    %c0_16 = arith.constant 0 : index
    %22 = vector.load %arg6[%c0_15, %c0_16] : memref<8x784xf32, #tpu.memory_space<vmem>>, vector<8x784xf32>
    tpu.vector_store %arg6[%c0_15, %c0_16], %21 {strides = array<i32>} : memref<8x784xf32, #tpu.memory_space<vmem>>, vector<8x784xf32>,
    return
  }
  func.func @transform_0(%arg0: i32) -> (i32, i32) {
    %c0_i32 = arith.constant 0 : i32
    %c0_i32_0 = arith.constant 0 : i32
    return %arg0, %c0_i32 : i32, i32
  }
  func.func @transform_1(%arg0: i32) -> (i32, i32) {
    %c0_i32 = arith.constant 0 : i32
    %c0_i32_0 = arith.constant 0 : i32
    %c0_i32_1 = arith.constant 0 : i32
    return %c0_i32, %c0_i32_0 : i32, i32
  }
  func.func @transform_2(%arg0: i32) -> (i32, i32) {
    %c0_i32 = arith.constant 0 : i32
    %c0_i32_0 = arith.constant 0 : i32
    %c0_i32_1 = arith.constant 0 : i32
    return %c0_i32, %c0_i32_0 : i32, i32
  }
  func.func @transform_3(%arg0: i32) -> (i32, i32) {
    %c0_i32 = arith.constant 0 : i32
    %c0_i32_0 = arith.constant 0 : i32
    %c0_i32_1 = arith.constant 0 : i32
    return %c0_i32, %c0_i32_0 : i32, i32
  }
  func.func @transform_4(%arg0: i32) -> (i32, i32) {
    %c0_i32 = arith.constant 0 : i32
    %c0_i32_0 = arith.constant 0 : i32
    %c0_i32_1 = arith.constant 0 : i32
    return %c0_i32, %c0_i32_0 : i32, i32
  }
  func.func @transform_5(%arg0: i32) -> (i32, i32) {
    %c0_i32 = arith.constant 0 : i32
    %c0_i32_0 = arith.constant 0 : i32
    return %arg0, %c0_i32 : i32, i32
  }
  func.func @transform_6(%arg0: i32) -> (i32, i32, i32) {
    %c0_i32 = arith.constant 0 : i32
    %c0_i32_0 = arith.constant 0 : i32
    %c0_i32_1 = arith.constant 0 : i32
    return %arg0, %c0_i32, %c0_i32_0 : i32, i32, i32
  }
}

</mosaic_0001>

<llo_original>
// kernel: sae_forward.1
$region0: #{sae_forward.1}
  #allocation0 [shape = 'u32[]', space=smem, size = 0x4, offset = 0x4, fixed_abs, tag = 'smem constant byte address 0x4 - core index']
  #allocation1 [shape = 'u32[144,128]{1,0:T(1,128)}', space=vmem, size = 0x12000, scoped, tag = 'internal scratch']
  %s0 = inlined_call_operand.vmem [shape: f32[8,784], index: 0, kind: input, shape index: {}]
  %s1 = inlined_call_operand.vmem [shape: f32[784,128], index: 1, kind: input, shape index: {}]
  %s2 = inlined_call_operand.vmem [shape: f32[1,128], index: 2, kind: input, shape index: {}]
  %s3 = inlined_call_operand.vmem [shape: f32[128,784], index: 3, kind: input, shape index: {}]
  %s4 = inlined_call_operand.vmem [shape: f32[1,784], index: 4, kind: input, shape index: {}]
  %s5 = inlined_call_operand.hbm [shape: f32[8,784], index: 5, kind: output, shape index: {0}]
  %s6 = inlined_call_operand.vmem [shape: f32[1,8,128], index: 6, kind: output, shape index: {1}]
  %7 = xla_tuple %s5, %s6
  %s8 = sld [smem:[#allocation0]]
  $region38: #{sae_forward.1} parent=0
    _
  %s10 = ssub.s32 1, %s8
  %s11 = scalar_select 0, %s10, %s8
  $region1: #{sae_forward.1} parent=0
    #allocation2 [shape = 'u8[28672]{0}', space=vmem, size = 0x7000, scoped, tag = 'output window, operand 0, single buffered']
    #allocation3 [shape = 's32[1]{0}', space=sflag, size = 0x4, scoped, tag = 'scoped memory for sae_forward.1']
    %12 = vsyncpa [#allocation3], 0
    // Predicated region
    $region2: #{sae_forward.1} parent=1 // pred_check
      _
    $region3: #{sae_forward.1} parent=1 // pred_check_branch
      %14 = sbr.rel (0) target = $region5
    $region4: #{sae_forward.1} parent=1 // pred_region
      _
    $region5: #{sae_forward.1} parent=1 // pred_fallthru
      _
    // Predicated region
    $region6: #{sae_forward.1} parent=1 // pred_check
      _
    $region7: #{sae_forward.1} parent=1 // pred_check_branch
      %16 = sbr.rel (0) target = $region9
    $region8: #{sae_forward.1} parent=1 // pred_region
      _
    $region9: #{sae_forward.1} parent=1 // pred_fallthru
      _
    // Predicated region
    $region10: #{sae_forward.1} parent=1 // pred_check
      _
    $region11: #{sae_forward.1} parent=1 // pred_check_branch
      %18 = sbr.rel (0) target = $region13
    $region12: #{sae_forward.1} parent=1 // pred_region
      _
    $region13: #{sae_forward.1} parent=1 // pred_fallthru
      _
    // Predicated region
    $region14: #{sae_forward.1} parent=1 // pred_check
      _
    $region15: #{sae_forward.1} parent=1 // pred_check_branch
      %20 = sbr.rel (0) target = $region17
    $region16: #{sae_forward.1} parent=1 // pred_region
      _
    $region17: #{sae_forward.1} parent=1 // pred_fallthru
      _
    // Predicated region
    $region18: #{sae_forward.1} parent=1 // pred_check
      _
    $region19: #{sae_forward.1} parent=1 // pred_check_branch
      %22 = sbr.rel (0) target = $region21
    $region20: #{sae_forward.1} parent=1 // pred_region
      _
    $region21: #{sae_forward.1} parent=1 // pred_fallthru
      _
    %v23 = vld [vmem:[%s0] sm:$0xff]
    %v24 = vld [vmem:[%s0 + $0x8] sm:$0xff]
    %v25 = vld [vmem:[%s0 + $0x10] sm:$0xff]
    %v26 = vld [vmem:[%s0 + $0x18] sm:$0xff]
    %v27 = vld [vmem:[%s0 + $0x20] sm:$0xff]
    %v28 = vld [vmem:[%s0 + $0x28] sm:$0xff]
    %v29 = vld [vmem:[%s0 + $0x30] sm:$0xff]
    %v30 = vld [vmem:[%s1] sm:$0xff]
    %v31 = vld [vmem:[%s1 + $0x8] sm:$0xff]
    %v32 = vld [vmem:[%s1 + $0x10] sm:$0xff]
    %v33 = vld [vmem:[%s1 + $0x18] sm:$0xff]
    %v34 = vld [vmem:[%s1 + $0x20] sm:$0xff]
    %v35 = vld [vmem:[%s1 + $0x28] sm:$0xff]
    %v36 = vld [vmem:[%s1 + $0x30] sm:$0xff]
    %v37 = vld [vmem:[%s1 + $0x38] sm:$0xff]
    %v38 = vld [vmem:[%s1 + $0x40] sm:$0xff]
    %v39 = vld [vmem:[%s1 + $0x48] sm:$0xff]
    %v40 = vld [vmem:[%s1 + $0x50] sm:$0xff]
    %v41 = vld [vmem:[%s1 + $0x58] sm:$0xff]
    %v42 = vld [vmem:[%s1 + $0x60] sm:$0xff]
    %v43 = vld [vmem:[%s1 + $0x68] sm:$0xff]
    %v44 = vld [vmem:[%s1 + $0x70] sm:$0xff]
    %v45 = vld [vmem:[%s1 + $0x78] sm:$0xff]
    %v46 = vld [vmem:[%s1 + $0x80] sm:$0xff]
    %v47 = vld [vmem:[%s1 + $0x88] sm:$0xff]
    %v48 = vld [vmem:[%s1 + $0x90] sm:$0xff]
    %v49 = vld [vmem:[%s1 + $0x98] sm:$0xff]
    %v50 = vld [vmem:[%s1 + $0xa0] sm:$0xff]
    %v51 = vld [vmem:[%s1 + $0xa8] sm:$0xff]
    %v52 = vld [vmem:[%s1 + $0xb0] sm:$0xff]
    %v53 = vld [vmem:[%s1 + $0xb8] sm:$0xff]
    %v54 = vld [vmem:[%s1 + $0xc0] sm:$0xff]
    %v55 = vld [vmem:[%s1 + $0xc8] sm:$0xff]
    %v56 = vld [vmem:[%s1 + $0xd0] sm:$0xff]
    %v57 = vld [vmem:[%s1 + $0xd8] sm:$0xff]
    %v58 = vld [vmem:[%s1 + $0xe0] sm:$0xff]
    %v59 = vld [vmem:[%s1 + $0xe8] sm:$0xff]
    %v60 = vld [vmem:[%s1 + $0xf0] sm:$0xff]
    %v61 = vld [vmem:[%s1 + $0xf8] sm:$0xff]
    %v62 = vld [vmem:[%s1 + $0x100] sm:$0xff]
    %v63 = vld [vmem:[%s1 + $0x108] sm:$0xff]
    %v64 = vld [vmem:[%s1 + $0x110] sm:$0xff]
    %v65 = vld [vmem:[%s1 + $0x118] sm:$0xff]
    %v66 = vld [vmem:[%s1 + $0x120] sm:$0xff]
    %v67 = vld [vmem:[%s1 + $0x128] sm:$0xff]
    %v68 = vld [vmem:[%s1 + $0x130] sm:$0xff]
    %v69 = vld [vmem:[%s1 + $0x138] sm:$0xff]
    %v70 = vld [vmem:[%s1 + $0x140] sm:$0xff]
    %v71 = vld [vmem:[%s1 + $0x148] sm:$0xff]
    %v72 = vld [vmem:[%s1 + $0x150] sm:$0xff]
    %v73 = vld [vmem:[%s1 + $0x158] sm:$0xff]
    %v74 = vld [vmem:[%s1 + $0x160] sm:$0xff]
    %v75 = vld [vmem:[%s1 + $0x168] sm:$0xff]
    %v76 = vld [vmem:[%s1 + $0x170] sm:$0xff]
    %v77 = vld [vmem:[%s1 + $0x178] sm:$0xff]
    %v78 = vld [vmem:[%s1 + $0x180] sm:$0xff]
    %v79 = vld [vmem:[%s1 + $0x188] sm:$0xff]
    %v80 = vld [vmem:[%s1 + $0x190] sm:$0xff]
    %v81 = vld [vmem:[%s1 + $0x198] sm:$0xff]
    %v82 = vld [vmem:[%s1 + $0x1a0] sm:$0xff]
    %v83 = vld [vmem:[%s1 + $0x1a8] sm:$0xff]
    %v84 = vld [vmem:[%s1 + $0x1b0] sm:$0xff]
    %v85 = vld [vmem:[%s1 + $0x1b8] sm:$0xff]
    %v86 = vld [vmem:[%s1 + $0x1c0] sm:$0xff]
    %v87 = vld [vmem:[%s1 + $0x1c8] sm:$0xff]
    %v88 = vld [vmem:[%s1 + $0x1d0] sm:$0xff]
    %v89 = vld [vmem:[%s1 + $0x1d8] sm:$0xff]
    %v90 = vld [vmem:[%s1 + $0x1e0] sm:$0xff]
    %v91 = vld [vmem:[%s1 + $0x1e8] sm:$0xff]
    %v92 = vld [vmem:[%s1 + $0x1f0] sm:$0xff]
    %v93 = vld [vmem:[%s1 + $0x1f8] sm:$0xff]
    %v94 = vld [vmem:[%s1 + $0x200] sm:$0xff]
    %v95 = vld [vmem:[%s1 + $0x208] sm:$0xff]
    %v96 = vld [vmem:[%s1 + $0x210] sm:$0xff]
    %v97 = vld [vmem:[%s1 + $0x218] sm:$0xff]
    %v98 = vld [vmem:[%s1 + $0x220] sm:$0xff]
    %v99 = vld [vmem:[%s1 + $0x228] sm:$0xff]
    %v100 = vld [vmem:[%s1 + $0x230] sm:$0xff]
    %v101 = vld [vmem:[%s1 + $0x238] sm:$0xff]
    %v102 = vld [vmem:[%s1 + $0x240] sm:$0xff]
    %v103 = vld [vmem:[%s1 + $0x248] sm:$0xff]
    %v104 = vld [vmem:[%s1 + $0x250] sm:$0xff]
    %v105 = vld [vmem:[%s1 + $0x258] sm:$0xff]
    %v106 = vld [vmem:[%s1 + $0x260] sm:$0xff]
    %v107 = vld [vmem:[%s1 + $0x268] sm:$0xff]
    %v108 = vld [vmem:[%s1 + $0x270] sm:$0xff]
    %v109 = vld [vmem:[%s1 + $0x278] sm:$0xff]
    %v110 = vld [vmem:[%s1 + $0x280] sm:$0xff]
    %v111 = vld [vmem:[%s1 + $0x288] sm:$0xff]
    %v112 = vld [vmem:[%s1 + $0x290] sm:$0xff]
    %v113 = vld [vmem:[%s1 + $0x298] sm:$0xff]
    %v114 = vld [vmem:[%s1 + $0x2a0] sm:$0xff]
    %v115 = vld [vmem:[%s1 + $0x2a8] sm:$0xff]
    %v116 = vld [vmem:[%s1 + $0x2b0] sm:$0xff]
    %v117 = vld [vmem:[%s1 + $0x2b8] sm:$0xff]
    %v118 = vld [vmem:[%s1 + $0x2c0] sm:$0xff]
    %v119 = vld [vmem:[%s1 + $0x2c8] sm:$0xff]
    %v120 = vld [vmem:[%s1 + $0x2d0] sm:$0xff]
    %v121 = vld [vmem:[%s1 + $0x2d8] sm:$0xff]
    %v122 = vld [vmem:[%s1 + $0x2e0] sm:$0xff]
    %v123 = vld [vmem:[%s1 + $0x2e8] sm:$0xff]
    %v124 = vld [vmem:[%s1 + $0x2f0] sm:$0xff]
    %v125 = vld [vmem:[%s1 + $0x2f8] sm:$0xff]
    %v126 = vld [vmem:[%s1 + $0x300] sm:$0xff]
    %v127 = vld [vmem:[%s1 + $0x308] sm:$0xff]
    %v128 = vld [vmem:[%s2] sm:$0x1]
    %v130 = vlaneseq
    %v131 = vshrl.u32 %v130, 7
    %v132 = vsub.s32 0, %v131
    %v133 = vrot.slane %v128, %v132
    %vm135 = vcmask 130048
    %v137 = vsel %vm135, %v29, 0
    %139 = vmatprep.subr.mxu0 0.0
    %140 = vmatpush1.msra.mxu0 %v30
    %141 = vmatprep.subr.mxu0 0.0
    %142 = vmatpush1.msra.mxu0 %v31
    %143 = vmatprep.subr.mxu0 0.0
    %144 = vmatpush1.msra.mxu0 %v32
    %145 = vmatprep.subr.mxu0 0.0
    %146 = vmatpush1.msra.mxu0 %v33
    %147 = vmatprep.subr.mxu0 0.0
    %148 = vmatpush1.msra.mxu0 %v34
    %149 = vmatprep.subr.mxu0 0.0
    %150 = vmatpush1.msra.mxu0 %v35
    %151 = vmatprep.subr.mxu0 0.0
    %152 = vmatpush1.msra.mxu0 %v36
    %153 = vmatprep.subr.mxu0 0.0
    %154 = vmatpush1.msra.mxu0 %v37
    %155 = vmatprep.subr.mxu0 0.0
    %156 = vmatpush1.msra.mxu0 %v38
    %157 = vmatprep.subr.mxu0 0.0
    %158 = vmatpush1.msra.mxu0 %v39
    %159 = vmatprep.subr.mxu0 0.0
    %160 = vmatpush1.msra.mxu0 %v40
    %161 = vmatprep.subr.mxu0 0.0
    %162 = vmatpush1.msra.mxu0 %v41
    %163 = vmatprep.subr.mxu0 0.0
    %164 = vmatpush1.msra.mxu0 %v42
    %165 = vmatprep.subr.mxu0 0.0
    %166 = vmatpush1.msra.mxu0 %v43
    %167 = vmatprep.subr.mxu0 0.0
    %168 = vmatpush1.msra.mxu0 %v44
    %169 = vmatprep.subr.mxu0 0.0
    %170 = vmatpush1.msra.mxu0 %v45
    %171 = vmatprep.subr.mxu0 0.0
    %172 = vmatpush1.msra.mxu0 %v46
    %173 = vmatprep.subr.mxu0 0.0
    %174 = vmatpush1.msra.mxu0 %v47
    %175 = vmatprep.subr.mxu0 0.0
    %176 = vmatpush1.msra.mxu0 %v48
    %177 = vmatprep.subr.mxu0 0.0
    %178 = vmatpush1.msra.mxu0 %v49
    %179 = vmatprep.subr.mxu0 0.0
    %180 = vmatpush1.msra.mxu0 %v50
    %181 = vmatprep.subr.mxu0 0.0
    %182 = vmatpush1.msra.mxu0 %v51
    %183 = vmatprep.subr.mxu0 0.0
    %184 = vmatpush1.msra.mxu0 %v52
    %185 = vmatprep.subr.mxu0 0.0
    %186 = vmatpush1.msra.mxu0 %v53
    %187 = vmatprep.subr.mxu0 0.0
    %188 = vmatpush1.msra.mxu0 %v54
    %189 = vmatprep.subr.mxu0 0.0
    %190 = vmatpush1.msra.mxu0 %v55
    %191 = vmatprep.subr.mxu0 0.0
    %192 = vmatpush1.msra.mxu0 %v56
    %193 = vmatprep.subr.mxu0 0.0
    %194 = vmatpush1.msra.mxu0 %v57
    %195 = vmatprep.subr.mxu0 0.0
    %196 = vmatpush1.msra.mxu0 %v58
    %197 = vmatprep.subr.mxu0 0.0
    %198 = vmatpush1.msra.mxu0 %v59
    %199 = vmatprep.subr.mxu0 0.0
    %200 = vmatpush1.msra.mxu0 %v60
    %201 = vmatprep.subr.mxu0 0.0
    %202 = vmatpush1.msra.mxu0 %v61
    %203 = vmatprep.mubr.f32.mxu0 %v24
    %204 = vmatmul.mubr.f32.gmra.mrb[0].mxu0 %v23
    %v205 = vpop.f32.mrb[0].mxu0
    %v206 = vadd.f32 %v133, %v205
    %v207 = vpop.f32.mrb[0].mxu0
    %208 = vdwg.mxu0
    %209 = vmatprep.subr.mxu0 0.0
    %210 = vmatpush1.msra.mxu0 %v62
    %211 = vmatprep.subr.mxu0 0.0
    %212 = vmatpush1.msra.mxu0 %v63
    %213 = vmatprep.subr.mxu0 0.0
    %214 = vmatpush1.msra.mxu0 %v64
    %215 = vmatprep.subr.mxu0 0.0
    %216 = vmatpush1.msra.mxu0 %v65
    %217 = vmatprep.subr.mxu0 0.0
    %218 = vmatpush1.msra.mxu0 %v66
    %219 = vmatprep.subr.mxu0 0.0
    %220 = vmatpush1.msra.mxu0 %v67
    %221 = vmatprep.subr.mxu0 0.0
    %222 = vmatpush1.msra.mxu0 %v68
    %223 = vmatprep.subr.mxu0 0.0
    %224 = vmatpush1.msra.mxu0 %v69
    %225 = vmatprep.subr.mxu0 0.0
    %226 = vmatpush1.msra.mxu0 %v70
    %227 = vmatprep.subr.mxu0 0.0
    %228 = vmatpush1.msra.mxu0 %v71
    %229 = vmatprep.subr.mxu0 0.0
    %230 = vmatpush1.msra.mxu0 %v72
    %231 = vmatprep.subr.mxu0 0.0
    %232 = vmatpush1.msra.mxu0 %v73
    %233 = vmatprep.subr.mxu0 0.0
    %234 = vmatpush1.msra.mxu0 %v74
    %235 = vmatprep.subr.mxu0 0.0
    %236 = vmatpush1.msra.mxu0 %v75
    %237 = vmatprep.subr.mxu0 0.0
    %238 = vmatpush1.msra.mxu0 %v76
    %239 = vmatprep.subr.mxu0 0.0
    %240 = vmatpush1.msra.mxu0 %v77
    %241 = vmatprep.subr.mxu0 0.0
    %242 = vmatpush1.msra.mxu0 %v78
    %243 = vmatprep.subr.mxu0 0.0
    %244 = vmatpush1.msra.mxu0 %v79
    %245 = vmatprep.subr.mxu0 0.0
    %246 = vmatpush1.msra.mxu0 %v80
    %247 = vmatprep.subr.mxu0 0.0
    %248 = vmatpush1.msra.mxu0 %v81
    %249 = vmatprep.subr.mxu0 0.0
    %250 = vmatpush1.msra.mxu0 %v82
    %251 = vmatprep.subr.mxu0 0.0
    %252 = vmatpush1.msra.mxu0 %v83
    %253 = vmatprep.subr.mxu0 0.0
    %254 = vmatpush1.msra.mxu0 %v84
    %255 = vmatprep.subr.mxu0 0.0
    %256 = vmatpush1.msra.mxu0 %v85
    %257 = vmatprep.subr.mxu0 0.0
    %258 = vmatpush1.msra.mxu0 %v86
    %259 = vmatprep.subr.mxu0 0.0
    %260 = vmatpush1.msra.mxu0 %v87
    %261 = vmatprep.subr.mxu0 0.0
    %262 = vmatpush1.msra.mxu0 %v88
    %263 = vmatprep.subr.mxu0 0.0
    %264 = vmatpush1.msra.mxu0 %v89
    %265 = vmatprep.subr.mxu0 0.0
    %266 = vmatpush1.msra.mxu0 %v90
    %267 = vmatprep.subr.mxu0 0.0
    %268 = vmatpush1.msra.mxu0 %v91
    %269 = vmatprep.subr.mxu0 0.0
    %270 = vmatpush1.msra.mxu0 %v92
    %271 = vmatprep.subr.mxu0 0.0
    %272 = vmatpush1.msra.mxu0 %v93
    %273 = vmatprep.mubr.f32.mxu0 %v26
    %274 = vmatmul.mubr.f32.gmra.mrb[0].mxu0 %v25
    %v275 = vpop.f32.mrb[0].mxu0
    %v276 = vadd.f32 %v206, %v275
    %v277 = vpop.f32.mrb[0].mxu0
    %278 = vdwg.mxu0
    %279 = vmatprep.subr.mxu0 0.0
    %280 = vmatpush1.msra.mxu0 %v94
    %281 = vmatprep.subr.mxu0 0.0
    %282 = vmatpush1.msra.mxu0 %v95
    %283 = vmatprep.subr.mxu0 0.0
    %284 = vmatpush1.msra.mxu0 %v96
    %285 = vmatprep.subr.mxu0 0.0
    %286 = vmatpush1.msra.mxu0 %v97
    %287 = vmatprep.subr.mxu0 0.0
    %288 = vmatpush1.msra.mxu0 %v98
    %289 = vmatprep.subr.mxu0 0.0
    %290 = vmatpush1.msra.mxu0 %v99
    %291 = vmatprep.subr.mxu0 0.0
    %292 = vmatpush1.msra.mxu0 %v100
    %293 = vmatprep.subr.mxu0 0.0
    %294 = vmatpush1.msra.mxu0 %v101
    %295 = vmatprep.subr.mxu0 0.0
    %296 = vmatpush1.msra.mxu0 %v102
    %297 = vmatprep.subr.mxu0 0.0
    %298 = vmatpush1.msra.mxu0 %v103
    %299 = vmatprep.subr.mxu0 0.0
    %300 = vmatpush1.msra.mxu0 %v104
    %301 = vmatprep.subr.mxu0 0.0
    %302 = vmatpush1.msra.mxu0 %v105
    %303 = vmatprep.subr.mxu0 0.0
    %304 = vmatpush1.msra.mxu0 %v106
    %305 = vmatprep.subr.mxu0 0.0
    %306 = vmatpush1.msra.mxu0 %v107
    %307 = vmatprep.subr.mxu0 0.0
    %308 = vmatpush1.msra.mxu0 %v108
    %309 = vmatprep.subr.mxu0 0.0
    %310 = vmatpush1.msra.mxu0 %v109
    %311 = vmatprep.subr.mxu0 0.0
    %312 = vmatpush1.msra.mxu0 %v110
    %313 = vmatprep.subr.mxu0 0.0
    %314 = vmatpush1.msra.mxu0 %v111
    %315 = vmatprep.subr.mxu0 0.0
    %316 = vmatpush1.msra.mxu0 %v112
    %317 = vmatprep.subr.mxu0 0.0
    %318 = vmatpush1.msra.mxu0 %v113
    %319 = vmatprep.subr.mxu0 0.0
    %320 = vmatpush1.msra.mxu0 %v114
    %321 = vmatprep.subr.mxu0 0.0
    %322 = vmatpush1.msra.mxu0 %v115
    %323 = vmatprep.subr.mxu0 0.0
    %324 = vmatpush1.msra.mxu0 %v116
    %325 = vmatprep.subr.mxu0 0.0
    %326 = vmatpush1.msra.mxu0 %v117
    %327 = vmatprep.subr.mxu0 0.0
    %328 = vmatpush1.msra.mxu0 %v118
    %329 = vmatprep.subr.mxu0 0.0
    %330 = vmatpush1.msra.mxu0 %v119
    %331 = vmatprep.subr.mxu0 0.0
    %332 = vmatpush1.msra.mxu0 %v120
    %333 = vmatprep.subr.mxu0 0.0
    %334 = vmatpush1.msra.mxu0 %v121
    %335 = vmatprep.subr.mxu0 0.0
    %336 = vmatpush1.msra.mxu0 %v122
    %337 = vmatprep.subr.mxu0 0.0
    %338 = vmatpush1.msra.mxu0 %v123
    %339 = vmatprep.subr.mxu0 0.0
    %340 = vmatpush1.msra.mxu0 %v124
    %341 = vmatprep.subr.mxu0 0.0
    %342 = vmatpush1.msra.mxu0 %v125
    %343 = vmatprep.mubr.f32.mxu0 %v28
    %344 = vmatmul.mubr.f32.gmra.mrb[0].mxu0 %v27
    %v345 = vpop.f32.mrb[0].mxu0
    %v346 = vadd.f32 %v276, %v345
    %v347 = vpop.f32.mrb[0].mxu0
    %348 = vdwg.mxu0
    %349 = vmatprep.subr.mxu0 0.0
    %350 = vmatpush1.msra.mxu0 %v126
    %351 = vmatprep.subr.mxu0 0.0
    %352 = vmatpush1.msra.mxu0 %v127
    %353 = vmatprep.subr.mxu0 0.0
    %354 = vmatpush1.msra.mxu0 0.0
    %355 = vmatprep.subr.mxu0 0.0
    %356 = vmatpush1.msra.mxu0 0.0
    %357 = vmatprep.subr.mxu0 0.0
    %358 = vmatpush1.msra.mxu0 0.0
    %359 = vmatprep.subr.mxu0 0.0
    %360 = vmatpush1.msra.mxu0 0.0
    %361 = vmatprep.subr.mxu0 0.0
    %362 = vmatpush1.msra.mxu0 0.0
    %363 = vmatprep.subr.mxu0 0.0
    %364 = vmatpush1.msra.mxu0 0.0
    %365 = vmatprep.subr.mxu0 0.0
    %366 = vmatpush1.msra.mxu0 0.0
    %367 = vmatprep.subr.mxu0 0.0
    %368 = vmatpush1.msra.mxu0 0.0
    %369 = vmatprep.subr.mxu0 0.0
    %370 = vmatpush1.msra.mxu0 0.0
    %371 = vmatprep.subr.mxu0 0.0
    %372 = vmatpush1.msra.mxu0 0.0
    %373 = vmatprep.subr.mxu0 0.0
    %374 = vmatpush1.msra.mxu0 0.0
    %375 = vmatprep.subr.mxu0 0.0
    %376 = vmatpush1.msra.mxu0 0.0
    %377 = vmatprep.subr.mxu0 0.0
    %378 = vmatpush1.msra.mxu0 0.0
    %379 = vmatprep.subr.mxu0 0.0
    %380 = vmatpush1.msra.mxu0 0.0
    %381 = vmatprep.subr.mxu0 0.0
    %382 = vmatpush1.msra.mxu0 0.0
    %383 = vmatprep.subr.mxu0 0.0
    %384 = vmatpush1.msra.mxu0 0.0
    %385 = vmatprep.subr.mxu0 0.0
    %386 = vmatpush1.msra.mxu0 0.0
    %387 = vmatprep.subr.mxu0 0.0
    %388 = vmatpush1.msra.mxu0 0.0
    %389 = vmatprep.subr.mxu0 0.0
    %390 = vmatpush1.msra.mxu0 0.0
    %391 = vmatprep.subr.mxu0 0.0
    %392 = vmatpush1.msra.mxu0 0.0
    %393 = vmatprep.subr.mxu0 0.0
    %394 = vmatpush1.msra.mxu0 0.0
    %395 = vmatprep.subr.mxu0 0.0
    %396 = vmatpush1.msra.mxu0 0.0
    %397 = vmatprep.subr.mxu0 0.0
    %398 = vmatpush1.msra.mxu0 0.0
    %399 = vmatprep.subr.mxu0 0.0
    %400 = vmatpush1.msra.mxu0 0.0
    %401 = vmatprep.subr.mxu0 0.0
    %402 = vmatpush1.msra.mxu0 0.0
    %403 = vmatprep.subr.mxu0 0.0
    %404 = vmatpush1.msra.mxu0 0.0
    %405 = vmatprep.subr.mxu0 0.0
    %406 = vmatpush1.msra.mxu0 0.0
    %407 = vmatprep.subr.mxu0 0.0
    %408 = vmatpush1.msra.mxu0 0.0
    %409 = vmatprep.subr.mxu0 0.0
    %410 = vmatpush1.msra.mxu0 0.0
    %411 = vmatprep.subr.mxu0 0.0
    %412 = vmatpush1.msra.mxu0 0.0
    %413 = vmatprep.mubr.f32.mxu0 0.0
    %414 = vmatmul.mubr.f32.gmra.mrb[0].mxu0 %v137
    %v415 = vpop.f32.mrb[0].mxu0
    %v416 = vadd.f32 %v346, %v415
    %v417 = vpop.f32.mrb[0].mxu0
    %418 = vdwg.mxu0
    %v419 = vxor.u32 %v416, 2147483648
    %v420 = vmul.f32 %v419, 1.442695
    %v421 = vpow.pop %v420
    %v422 = vadd.f32 %v421, 1.0
    %v423 = vrcp.pop %v422
    %v424 = vmul.f32 1.0, %v423
    %v425 = vrot.slane %v424, 4
    %v426 = vadd.f32 %v424, %v425
    %v427 = vrot.slane %v426, 2
    %v428 = vadd.f32 %v426, %v427
    %v429 = vrot.slane %v428, 1
    %v430 = vadd.f32 %v428, %v429
    %431 = vst [vmem:[%s6] sm:$0xff] %v430
    %v432 = vld [vmem:[%s3] sm:$0xff]
    %v433 = vld [vmem:[%s3 + $0x8] sm:$0xff]
    %v434 = vld [vmem:[%s3 + $0x10] sm:$0xff]
    %v435 = vld [vmem:[%s3 + $0x18] sm:$0xff]
    %v436 = vld [vmem:[%s3 + $0x20] sm:$0xff]
    %v437 = vld [vmem:[%s3 + $0x28] sm:$0xff]
    %v438 = vld [vmem:[%s3 + $0x30] sm:$0xff]
    %v439 = vld [vmem:[%s3 + $0x38] sm:$0xff]
    %v440 = vld [vmem:[%s3 + $0x40] sm:$0xff]
    %v441 = vld [vmem:[%s3 + $0x48] sm:$0xff]
    %v442 = vld [vmem:[%s3 + $0x50] sm:$0xff]
    %v443 = vld [vmem:[%s3 + $0x58] sm:$0xff]
    %v444 = vld [vmem:[%s3 + $0x60] sm:$0xff]
    %v445 = vld [vmem:[%s3 + $0x68] sm:$0xff]
    %v446 = vld [vmem:[%s3 + $0x70] sm:$0xff]
    %v447 = vld [vmem:[%s3 + $0x78] sm:$0xff]
    %v448 = vld [vmem:[%s3 + $0x80] sm:$0xff]
    %v449 = vld [vmem:[%s3 + $0x88] sm:$0xff]
    %v450 = vld [vmem:[%s3 + $0x90] sm:$0xff]
    %v451 = vld [vmem:[%s3 + $0x98] sm:$0xff]
    %v452 = vld [vmem:[%s3 + $0xa0] sm:$0xff]
    %v453 = vld [vmem:[%s3 + $0xa8] sm:$0xff]
    %v454 = vld [vmem:[%s3 + $0xb0] sm:$0xff]
    %v455 = vld [vmem:[%s3 + $0xb8] sm:$0xff]
    %v456 = vld [vmem:[%s3 + $0xc0] sm:$0xff]
    %v457 = vld [vmem:[%s3 + $0xc8] sm:$0xff]
    %v458 = vld [vmem:[%s3 + $0xd0] sm:$0xff]
    %v459 = vld [vmem:[%s3 + $0xd8] sm:$0xff]
    %v460 = vld [vmem:[%s3 + $0xe0] sm:$0xff]
    %v461 = vld [vmem:[%s3 + $0xe8] sm:$0xff]
    %v462 = vld [vmem:[%s3 + $0xf0] sm:$0xff]
    %v463 = vld [vmem:[%s3 + $0xf8] sm:$0xff]
    %v464 = vld [vmem:[%s3 + $0x100] sm:$0xff]
    %v465 = vld [vmem:[%s3 + $0x108] sm:$0xff]
    %v466 = vld [vmem:[%s3 + $0x110] sm:$0xff]
    %v467 = vld [vmem:[%s3 + $0x118] sm:$0xff]
    %v468 = vld [vmem:[%s3 + $0x120] sm:$0xff]
    %v469 = vld [vmem:[%s3 + $0x128] sm:$0xff]
    %v470 = vld [vmem:[%s3 + $0x130] sm:$0xff]
    %v471 = vld [vmem:[%s3 + $0x138] sm:$0xff]
    %v472 = vld [vmem:[%s3 + $0x140] sm:$0xff]
    %v473 = vld [vmem:[%s3 + $0x148] sm:$0xff]
    %v474 = vld [vmem:[%s3 + $0x150] sm:$0xff]
    %v475 = vld [vmem:[%s3 + $0x158] sm:$0xff]
    %v476 = vld [vmem:[%s3 + $0x160] sm:$0xff]
    %v477 = vld [vmem:[%s3 + $0x168] sm:$0xff]
    %v478 = vld [vmem:[%s3 + $0x170] sm:$0xff]
    %v479 = vld [vmem:[%s3 + $0x178] sm:$0xff]
    %v480 = vld [vmem:[%s3 + $0x180] sm:$0xff]
    %v481 = vld [vmem:[%s3 + $0x188] sm:$0xff]
    %v482 = vld [vmem:[%s3 + $0x190] sm:$0xff]
    %v483 = vld [vmem:[%s3 + $0x198] sm:$0xff]
    %v484 = vld [vmem:[%s3 + $0x1a0] sm:$0xff]
    %v485 = vld [vmem:[%s3 + $0x1a8] sm:$0xff]
    %v486 = vld [vmem:[%s3 + $0x1b0] sm:$0xff]
    %v487 = vld [vmem:[%s3 + $0x1b8] sm:$0xff]
    %v488 = vld [vmem:[%s3 + $0x1c0] sm:$0xff]
    %v489 = vld [vmem:[%s3 + $0x1c8] sm:$0xff]
    %v490 = vld [vmem:[%s3 + $0x1d0] sm:$0xff]
    %v491 = vld [vmem:[%s3 + $0x1d8] sm:$0xff]
    %v492 = vld [vmem:[%s3 + $0x1e0] sm:$0xff]
    %v493 = vld [vmem:[%s3 + $0x1e8] sm:$0xff]
    %v494 = vld [vmem:[%s3 + $0x1f0] sm:$0xff]
    %v495 = vld [vmem:[%s3 + $0x1f8] sm:$0xff]
    %v496 = vld [vmem:[%s3 + $0x200] sm:$0xff]
    %v497 = vld [vmem:[%s3 + $0x208] sm:$0xff]
    %v498 = vld [vmem:[%s3 + $0x210] sm:$0xff]
    %v499 = vld [vmem:[%s3 + $0x218] sm:$0xff]
    %v500 = vld [vmem:[%s3 + $0x220] sm:$0xff]
    %v501 = vld [vmem:[%s3 + $0x228] sm:$0xff]
    %v502 = vld [vmem:[%s3 + $0x230] sm:$0xff]
    %v503 = vld [vmem:[%s3 + $0x238] sm:$0xff]
    %v504 = vld [vmem:[%s3 + $0x240] sm:$0xff]
    %v505 = vld [vmem:[%s3 + $0x248] sm:$0xff]
    %v506 = vld [vmem:[%s3 + $0x250] sm:$0xff]
    %v507 = vld [vmem:[%s3 + $0x258] sm:$0xff]
    %v508 = vld [vmem:[%s3 + $0x260] sm:$0xff]
    %v509 = vld [vmem:[%s3 + $0x268] sm:$0xff]
    %v510 = vld [vmem:[%s3 + $0x270] sm:$0xff]
    %v511 = vld [vmem:[%s3 + $0x278] sm:$0xff]
    %v512 = vld [vmem:[%s3 + $0x280] sm:$0xff]
    %v513 = vld [vmem:[%s3 + $0x288] sm:$0xff]
    %v514 = vld [vmem:[%s3 + $0x290] sm:$0xff]
    %v515 = vld [vmem:[%s3 + $0x298] sm:$0xff]
    %v516 = vld [vmem:[%s3 + $0x2a0] sm:$0xff]
    %v517 = vld [vmem:[%s3 + $0x2a8] sm:$0xff]
    %v518 = vld [vmem:[%s3 + $0x2b0] sm:$0xff]
    %v519 = vld [vmem:[%s3 + $0x2b8] sm:$0xff]
    %v520 = vld [vmem:[%s3 + $0x2c0] sm:$0xff]
    %v521 = vld [vmem:[%s3 + $0x2c8] sm:$0xff]
    %v522 = vld [vmem:[%s3 + $0x2d0] sm:$0xff]
    %v523 = vld [vmem:[%s3 + $0x2d8] sm:$0xff]
    %v524 = vld [vmem:[%s3 + $0x2e0] sm:$0xff]
    %v525 = vld [vmem:[%s3 + $0x2e8] sm:$0xff]
    %v526 = vld [vmem:[%s3 + $0x2f0] sm:$0xff]
    %v527 = vld [vmem:[%s3 + $0x2f8] sm:$0xff]
    %v528 = vld [vmem:[%s3 + $0x300] sm:$0xff]
    %v529 = vld [vmem:[%s3 + $0x308] sm:$0xff]
    %v530 = vld [vmem:[%s3 + $0x310] sm:$0xff]
    %v531 = vld [vmem:[%s3 + $0x318] sm:$0xff]
    %v532 = vld [vmem:[%s3 + $0x320] sm:$0xff]
    %v533 = vld [vmem:[%s3 + $0x328] sm:$0xff]
    %v534 = vld [vmem:[%s3 + $0x330] sm:$0xff]
    %v535 = vld [vmem:[%s3 + $0x338] sm:$0xff]
    %v536 = vld [vmem:[%s3 + $0x340] sm:$0xff]
    %v537 = vld [vmem:[%s3 + $0x348] sm:$0xff]
    %v538 = vld [vmem:[%s3 + $0x350] sm:$0xff]
    %v539 = vld [vmem:[%s3 + $0x358] sm:$0xff]
    %v540 = vld [vmem:[%s3 + $0x360] sm:$0xff]
    %v541 = vld [vmem:[%s3 + $0x368] sm:$0xff]
    %v542 = vld [vmem:[%s3 + $0x370] sm:$0xff]
    %v543 = vld [vmem:[%s3 + $0x378] sm:$0xff]
    %v544 = vld [vmem:[%s4] sm:$0x7f]
    %v546 = vlaneseq
    %v547 = vshrl.u32 %v546, 7
    %v548 = vsub.s32 0, %v547
    %v549 = vrot.slane %v544, %v548
    %v550 = vlaneseq
    %v551 = vshrl.u32 %v550, 7
    %v552 = vsub.s32 1, %v551
    %v553 = vrot.slane %v544, %v552
    %v554 = vlaneseq
    %v555 = vshrl.u32 %v554, 7
    %v556 = vsub.s32 2, %v555
    %v557 = vrot.slane %v544, %v556
    %v558 = vlaneseq
    %v559 = vshrl.u32 %v558, 7
    %v560 = vsub.s32 3, %v559
    %v561 = vrot.slane %v544, %v560
    %v562 = vlaneseq
    %v563 = vshrl.u32 %v562, 7
    %v564 = vsub.s32 4, %v563
    %v565 = vrot.slane %v544, %v564
    %v566 = vlaneseq
    %v567 = vshrl.u32 %v566, 7
    %v568 = vsub.s32 5, %v567
    %v569 = vrot.slane %v544, %v568
    %v570 = vlaneseq
    %v571 = vshrl.u32 %v570, 7
    %v572 = vsub.s32 6, %v571
    %v573 = vrot.slane %v544, %v572
    %581 = vmatprep.subr.mxu0 %v433
    %582 = vmatpush1.msra.mxu0 %v432
    %583 = vmatprep.subr.mxu0 %v440
    %584 = vmatpush1.msra.mxu0 %v439
    %585 = vmatprep.subr.mxu0 %v447
    %586 = vmatpush1.msra.mxu0 %v446
    %587 = vmatprep.subr.mxu0 %v454
    %588 = vmatpush1.msra.mxu0 %v453
    %589 = vmatprep.subr.mxu0 %v461
    %590 = vmatpush1.msra.mxu0 %v460
    %591 = vmatprep.subr.mxu0 %v468
    %592 = vmatpush1.msra.mxu0 %v467
    %593 = vmatprep.subr.mxu0 %v475
    %594 = vmatpush1.msra.mxu0 %v474
    %595 = vmatprep.subr.mxu0 %v482
    %596 = vmatpush1.msra.mxu0 %v481
    %597 = vmatprep.subr.mxu0 %v489
    %598 = vmatpush1.msra.mxu0 %v488
    %599 = vmatprep.subr.mxu0 %v496
    %600 = vmatpush1.msra.mxu0 %v495
    %601 = vmatprep.subr.mxu0 %v503
    %602 = vmatpush1.msra.mxu0 %v502
    %603 = vmatprep.subr.mxu0 %v510
    %604 = vmatpush1.msra.mxu0 %v509
    %605 = vmatprep.subr.mxu0 %v517
    %606 = vmatpush1.msra.mxu0 %v516
    %607 = vmatprep.subr.mxu0 %v524
    %608 = vmatpush1.msra.mxu0 %v523
    %609 = vmatprep.subr.mxu0 %v531
    %610 = vmatpush1.msra.mxu0 %v530
    %611 = vmatprep.subr.mxu0 %v538
    %612 = vmatpush1.msra.mxu0 %v537
    %613 = vmatprep.subr.mxu0 0.0
    %614 = vmatpush1.msra.mxu0 0.0
    %615 = vmatprep.subr.mxu0 0.0
    %616 = vmatpush1.msra.mxu0 0.0
    %617 = vmatprep.subr.mxu0 0.0
    %618 = vmatpush1.msra.mxu0 0.0
    %619 = vmatprep.subr.mxu0 0.0
    %620 = vmatpush1.msra.mxu0 0.0
    %621 = vmatprep.subr.mxu0 0.0
    %622 = vmatpush1.msra.mxu0 0.0
    %623 = vmatprep.subr.mxu0 0.0
    %624 = vmatpush1.msra.mxu0 0.0
    %625 = vmatprep.subr.mxu0 0.0
    %626 = vmatpush1.msra.mxu0 0.0
    %627 = vmatprep.subr.mxu0 0.0
    %628 = vmatpush1.msra.mxu0 0.0
    %629 = vmatprep.subr.mxu0 0.0
    %630 = vmatpush1.msra.mxu0 0.0
    %631 = vmatprep.subr.mxu0 0.0
    %632 = vmatpush1.msra.mxu0 0.0
    %633 = vmatprep.subr.mxu0 0.0
    %634 = vmatpush1.msra.mxu0 0.0
    %635 = vmatprep.subr.mxu0 0.0
    %636 = vmatpush1.msra.mxu0 0.0
    %637 = vmatprep.subr.mxu0 0.0
    %638 = vmatpush1.msra.mxu0 0.0
    %639 = vmatprep.subr.mxu0 0.0
    %640 = vmatpush1.msra.mxu0 0.0
    %641 = vmatprep.subr.mxu0 0.0
    %642 = vmatpush1.msra.mxu0 0.0
    %643 = vmatprep.subr.mxu0 0.0
    %644 = vmatpush1.msra.mxu0 0.0
    %645 = vmatprep.mubr.f32.mxu0 0.0
    %646 = vmatmul.mubr.f32.gmra.mrb[0].mxu0 %v424
    %v647 = vpop.f32.mrb[0].mxu0
    %v648 = vadd.f32 %v549, %v647
    %v649 = vpop.f32.mrb[0].mxu0
    %v650 = vadd.f32 %v553, %v649
    %651 = vdwg.mxu0
    %652 = vmatprep.subr.mxu0 %v435
    %653 = vmatpush1.msra.mxu0 %v434
    %654 = vmatprep.subr.mxu0 %v442
    %655 = vmatpush1.msra.mxu0 %v441
    %656 = vmatprep.subr.mxu0 %v449
    %657 = vmatpush1.msra.mxu0 %v448
    %658 = vmatprep.subr.mxu0 %v456
    %659 = vmatpush1.msra.mxu0 %v455
    %660 = vmatprep.subr.mxu0 %v463
    %661 = vmatpush1.msra.mxu0 %v462
    %662 = vmatprep.subr.mxu0 %v470
    %663 = vmatpush1.msra.mxu0 %v469
    %664 = vmatprep.subr.mxu0 %v477
    %665 = vmatpush1.msra.mxu0 %v476
    %666 = vmatprep.subr.mxu0 %v484
    %667 = vmatpush1.msra.mxu0 %v483
    %668 = vmatprep.subr.mxu0 %v491
    %669 = vmatpush1.msra.mxu0 %v490
    %670 = vmatprep.subr.mxu0 %v498
    %671 = vmatpush1.msra.mxu0 %v497
    %672 = vmatprep.subr.mxu0 %v505
    %673 = vmatpush1.msra.mxu0 %v504
    %674 = vmatprep.subr.mxu0 %v512
    %675 = vmatpush1.msra.mxu0 %v511
    %676 = vmatprep.subr.mxu0 %v519
    %677 = vmatpush1.msra.mxu0 %v518
    %678 = vmatprep.subr.mxu0 %v526
    %679 = vmatpush1.msra.mxu0 %v525
    %680 = vmatprep.subr.mxu0 %v533
    %681 = vmatpush1.msra.mxu0 %v532
    %682 = vmatprep.subr.mxu0 %v540
    %683 = vmatpush1.msra.mxu0 %v539
    %684 = vmatprep.subr.mxu0 0.0
    %685 = vmatpush1.msra.mxu0 0.0
    %686 = vmatprep.subr.mxu0 0.0
    %687 = vmatpush1.msra.mxu0 0.0
    %688 = vmatprep.subr.mxu0 0.0
    %689 = vmatpush1.msra.mxu0 0.0
    %690 = vmatprep.subr.mxu0 0.0
    %691 = vmatpush1.msra.mxu0 0.0
    %692 = vmatprep.subr.mxu0 0.0
    %693 = vmatpush1.msra.mxu0 0.0
    %694 = vmatprep.subr.mxu0 0.0
    %695 = vmatpush1.msra.mxu0 0.0
    %696 = vmatprep.subr.mxu0 0.0
    %697 = vmatpush1.msra.mxu0 0.0
    %698 = vmatprep.subr.mxu0 0.0
    %699 = vmatpush1.msra.mxu0 0.0
    %700 = vmatprep.subr.mxu0 0.0
    %701 = vmatpush1.msra.mxu0 0.0
    %702 = vmatprep.subr.mxu0 0.0
    %703 = vmatpush1.msra.mxu0 0.0
    %704 = vmatprep.subr.mxu0 0.0
    %705 = vmatpush1.msra.mxu0 0.0
    %706 = vmatprep.subr.mxu0 0.0
    %707 = vmatpush1.msra.mxu0 0.0
    %708 = vmatprep.subr.mxu0 0.0
    %709 = vmatpush1.msra.mxu0 0.0
    %710 = vmatprep.subr.mxu0 0.0
    %711 = vmatpush1.msra.mxu0 0.0
    %712 = vmatprep.subr.mxu0 0.0
    %713 = vmatpush1.msra.mxu0 0.0
    %714 = vmatprep.subr.mxu0 0.0
    %715 = vmatpush1.msra.mxu0 0.0
    %716 = vmatprep.mubr.f32.mxu0 0.0
    %717 = vmatmul.mubr.f32.gmra.mrb[0].mxu0 %v424
    %v718 = vpop.f32.mrb[0].mxu0
    %v719 = vadd.f32 %v557, %v718
    %v720 = vpop.f32.mrb[0].mxu0
    %v721 = vadd.f32 %v561, %v720
    %722 = vdwg.mxu0
    %723 = vmatprep.subr.mxu0 %v437
    %724 = vmatpush1.msra.mxu0 %v436
    %725 = vmatprep.subr.mxu0 %v444
    %726 = vmatpush1.msra.mxu0 %v443
    %727 = vmatprep.subr.mxu0 %v451
    %728 = vmatpush1.msra.mxu0 %v450
    %729 = vmatprep.subr.mxu0 %v458
    %730 = vmatpush1.msra.mxu0 %v457
    %731 = vmatprep.subr.mxu0 %v465
    %732 = vmatpush1.msra.mxu0 %v464
    %733 = vmatprep.subr.mxu0 %v472
    %734 = vmatpush1.msra.mxu0 %v471
    %735 = vmatprep.subr.mxu0 %v479
    %736 = vmatpush1.msra.mxu0 %v478
    %737 = vmatprep.subr.mxu0 %v486
    %738 = vmatpush1.msra.mxu0 %v485
    %739 = vmatprep.subr.mxu0 %v493
    %740 = vmatpush1.msra.mxu0 %v492
    %741 = vmatprep.subr.mxu0 %v500
    %742 = vmatpush1.msra.mxu0 %v499
    %743 = vmatprep.subr.mxu0 %v507
    %744 = vmatpush1.msra.mxu0 %v506
    %745 = vmatprep.subr.mxu0 %v514
    %746 = vmatpush1.msra.mxu0 %v513
    %747 = vmatprep.subr.mxu0 %v521
    %748 = vmatpush1.msra.mxu0 %v520
    %749 = vmatprep.subr.mxu0 %v528
    %750 = vmatpush1.msra.mxu0 %v527
    %751 = vmatprep.subr.mxu0 %v535
    %752 = vmatpush1.msra.mxu0 %v534
    %753 = vmatprep.subr.mxu0 %v542
    %754 = vmatpush1.msra.mxu0 %v541
    %755 = vmatprep.subr.mxu0 0.0
    %756 = vmatpush1.msra.mxu0 0.0
    %757 = vmatprep.subr.mxu0 0.0
    %758 = vmatpush1.msra.mxu0 0.0
    %759 = vmatprep.subr.mxu0 0.0
    %760 = vmatpush1.msra.mxu0 0.0
    %761 = vmatprep.subr.mxu0 0.0
    %762 = vmatpush1.msra.mxu0 0.0
    %763 = vmatprep.subr.mxu0 0.0
    %764 = vmatpush1.msra.mxu0 0.0
    %765 = vmatprep.subr.mxu0 0.0
    %766 = vmatpush1.msra.mxu0 0.0
    %767 = vmatprep.subr.mxu0 0.0
    %768 = vmatpush1.msra.mxu0 0.0
    %769 = vmatprep.subr.mxu0 0.0
    %770 = vmatpush1.msra.mxu0 0.0
    %771 = vmatprep.subr.mxu0 0.0
    %772 = vmatpush1.msra.mxu0 0.0
    %773 = vmatprep.subr.mxu0 0.0
    %774 = vmatpush1.msra.mxu0 0.0
    %775 = vmatprep.subr.mxu0 0.0
    %776 = vmatpush1.msra.mxu0 0.0
    %777 = vmatprep.subr.mxu0 0.0
    %778 = vmatpush1.msra.mxu0 0.0
    %779 = vmatprep.subr.mxu0 0.0
    %780 = vmatpush1.msra.mxu0 0.0
    %781 = vmatprep.subr.mxu0 0.0
    %782 = vmatpush1.msra.mxu0 0.0
    %783 = vmatprep.subr.mxu0 0.0
    %784 = vmatpush1.msra.mxu0 0.0
    %785 = vmatprep.subr.mxu0 0.0
    %786 = vmatpush1.msra.mxu0 0.0
    %787 = vmatprep.mubr.f32.mxu0 0.0
    %788 = vmatmul.mubr.f32.gmra.mrb[0].mxu0 %v424
    %v789 = vpop.f32.mrb[0].mxu0
    %v790 = vadd.f32 %v565, %v789
    %v791 = vpop.f32.mrb[0].mxu0
    %v792 = vadd.f32 %v569, %v791
    %793 = vdwg.mxu0
    %794 = vmatprep.subr.mxu0 0.0
    %795 = vmatpush1.msra.mxu0 %v438
    %796 = vmatprep.subr.mxu0 0.0
    %797 = vmatpush1.msra.mxu0 %v445
    %798 = vmatprep.subr.mxu0 0.0
    %799 = vmatpush1.msra.mxu0 %v452
    %800 = vmatprep.subr.mxu0 0.0
    %801 = vmatpush1.msra.mxu0 %v459
    %802 = vmatprep.subr.mxu0 0.0
    %803 = vmatpush1.msra.mxu0 %v466
    %804 = vmatprep.subr.mxu0 0.0
    %805 = vmatpush1.msra.mxu0 %v473
    %806 = vmatprep.subr.mxu0 0.0
    %807 = vmatpush1.msra.mxu0 %v480
    %808 = vmatprep.subr.mxu0 0.0
    %809 = vmatpush1.msra.mxu0 %v487
    %810 = vmatprep.subr.mxu0 0.0
    %811 = vmatpush1.msra.mxu0 %v494
    %812 = vmatprep.subr.mxu0 0.0
    %813 = vmatpush1.msra.mxu0 %v501
    %814 = vmatprep.subr.mxu0 0.0
    %815 = vmatpush1.msra.mxu0 %v508
    %816 = vmatprep.subr.mxu0 0.0
    %817 = vmatpush1.msra.mxu0 %v515
    %818 = vmatprep.subr.mxu0 0.0
    %819 = vmatpush1.msra.mxu0 %v522
    %820 = vmatprep.subr.mxu0 0.0
    %821 = vmatpush1.msra.mxu0 %v529
    %822 = vmatprep.subr.mxu0 0.0
    %823 = vmatpush1.msra.mxu0 %v536
    %824 = vmatprep.subr.mxu0 0.0
    %825 = vmatpush1.msra.mxu0 %v543
    %826 = vmatprep.subr.mxu0 0.0
    %827 = vmatpush1.msra.mxu0 0.0
    %828 = vmatprep.subr.mxu0 0.0
    %829 = vmatpush1.msra.mxu0 0.0
    %830 = vmatprep.subr.mxu0 0.0
    %831 = vmatpush1.msra.mxu0 0.0
    %832 = vmatprep.subr.mxu0 0.0
    %833 = vmatpush1.msra.mxu0 0.0
    %834 = vmatprep.subr.mxu0 0.0
    %835 = vmatpush1.msra.mxu0 0.0
    %836 = vmatprep.subr.mxu0 0.0
    %837 = vmatpush1.msra.mxu0 0.0
    %838 = vmatprep.subr.mxu0 0.0
    %839 = vmatpush1.msra.mxu0 0.0
    %840 = vmatprep.subr.mxu0 0.0
    %841 = vmatpush1.msra.mxu0 0.0
    %842 = vmatprep.subr.mxu0 0.0
    %843 = vmatpush1.msra.mxu0 0.0
    %844 = vmatprep.subr.mxu0 0.0
    %845 = vmatpush1.msra.mxu0 0.0
    %846 = vmatprep.subr.mxu0 0.0
    %847 = vmatpush1.msra.mxu0 0.0
    %848 = vmatprep.subr.mxu0 0.0
    %849 = vmatpush1.msra.mxu0 0.0
    %850 = vmatprep.subr.mxu0 0.0
    %851 = vmatpush1.msra.mxu0 0.0
    %852 = vmatprep.subr.mxu0 0.0
    %853 = vmatpush1.msra.mxu0 0.0
    %854 = vmatprep.subr.mxu0 0.0
    %855 = vmatpush1.msra.mxu0 0.0
    %856 = vmatprep.subr.mxu0 0.0
    %857 = vmatpush1.msra.mxu0 0.0
    %858 = vmatprep.mubr.f32.mxu0 0.0
    %859 = vmatmul.mubr.f32.gmra.mrb[0].mxu0 %v424
    %v860 = vpop.f32.mrb[0].mxu0
    %v861 = vadd.f32 %v573, %v860
    %v862 = vpop.f32.mrb[0].mxu0
    %863 = vdwg.mxu0
    %v864 = vtanh.pop %v648
    %v865 = vtanh.pop %v650
    %v866 = vtanh.pop %v719
    %v867 = vtanh.pop %v721
    %v868 = vtanh.pop %v790
    %v869 = vtanh.pop %v792
    %v870 = vtanh.pop %v861
    %871 = vst [vmem:[#allocation2] sm:$0xff] %v864
    %872 = vst [vmem:[#allocation2 + $0x8] sm:$0xff] %v865
    %873 = vst [vmem:[#allocation2 + $0x10] sm:$0xff] %v866
    %874 = vst [vmem:[#allocation2 + $0x18] sm:$0xff] %v867
    %875 = vst [vmem:[#allocation2 + $0x20] sm:$0xff] %v868
    %876 = vst [vmem:[#allocation2 + $0x28] sm:$0xff] %v869
    %877 = vst.msk [vmem:[#allocation2 + $0x30] sm:$0xff] %vm135, %v870
    // Predicated region
    $region22: #{sae_forward.1} parent=1 // pred_check
      _
    $region23: #{sae_forward.1} parent=1 // pred_check_branch
      %879 = sbr.rel (0) target = $region25
    $region24: #{sae_forward.1} parent=1 // pred_region
      %s881 = ssub.s32 896, 896
      %882 = vsyncadd [#allocation3], %s881
      %s884 = sshll.u32 [#allocation2], 4
      %s885 = int_to_ptr.vmem [resolvable:$true] %s884
      %887 = dma.vmem_to_hbm [thread:$0]  %s885, 896, %s5, [#allocation3]
    $region25: #{sae_forward.1} parent=1 // pred_fallthru
      _
    // Predicated region
    $region26: #{sae_forward.1} parent=1 // pred_check
      _
    $region27: #{sae_forward.1} parent=1 // pred_check_branch
      %889 = sbr.rel (0) target = $region29
    $region28: #{sae_forward.1} parent=1 // pred_region
      _
    $region29: #{sae_forward.1} parent=1 // pred_fallthru
      _
    // Predicated region
    $region30: #{sae_forward.1} parent=1 // pred_check
      _
    $region31: #{sae_forward.1} parent=1 // pred_check_branch
      %891 = sbr.rel (0) target = $region33
    $region32: #{sae_forward.1} parent=1 // pred_region
      %892 = dma.done [#allocation3], 896
    $region33: #{sae_forward.1} parent=1 // pred_fallthru
      _
    // Predicated region
    $region34: #{sae_forward.1} parent=1 // pred_check
      _
    $region35: #{sae_forward.1} parent=1 // pred_check_branch
      %894 = sbr.rel (0) target = $region37
    $region36: #{sae_forward.1} parent=1 // pred_region
      _
    $region37: #{sae_forward.1} parent=1 // pred_fallthru
      _
    %895 = vsyncpa [#allocation3], 1

</llo_original>
